<compile_context>
chip_gen: v5e
topology: v5e:2x2
jax: 0.10.0
libtpu: 0.0.40
codegen_flags: <defaults>
</compile_context>

<pallas_src>
import jax
import jax.numpy as jnp
from jax.experimental import pallas as pl
from jax.experimental.pallas import tpu as pltpu


def _round_up(x, m):
    return ((x + m - 1) // m) * m


def _vmem_budget_bytes():
    """Per-generation scoped-VMEM budget (also used for tile sizing)."""
    kind = ""
    try:
        kind = jax.devices()[0].device_kind.lower()
    except Exception:
        pass
    if "v5" in kind or "v6" in kind:
        return 100 * 1024 * 1024          # 128 MiB parts (v5e/v5p/v6e)
    return 48 * 1024 * 1024               # v7x (64 MiB / TC) and unknown: conservative


# ---------------------------------------------------------------------------
# Kernels
# ---------------------------------------------------------------------------

def _nn_kernel(x_ref, w1_ref, b1_ref, w2_ref, b2_ref, o_ref):
    # x_ref : [TB, D_in]      (VMEM, input dtype)
    # w1_ref: [D_in, H_p]     (VMEM, compute dtype)  fc1.weight.T (H padded, resident)
    # b1_ref: [1, H_p]        (VMEM, f32)
    # w2_ref: [H_p, D_out_p]  (VMEM, compute dtype)  out.weight.T (resident)
    # b2_ref: [1, D_out_p]    (VMEM, f32)
    # o_ref : [TB, D_out_p]
    x = x_ref[...].astype(w1_ref.dtype)
    h = jnp.dot(x, w1_ref[...], preferred_element_type=jnp.float32)
    h = jnp.maximum(h + b1_ref[...], 0.0)               # bias + ReLU in f32 (VPU)
    y = jnp.dot(h.astype(w2_ref.dtype), w2_ref[...],
                preferred_element_type=jnp.float32)
    o_ref[...] = (y + b2_ref[...]).astype(o_ref.dtype)


def _nn_kernel_htiled(x_ref, w1_ref, b1_ref, w2_ref, b2_ref, o_ref, acc_ref):
    # Hidden-dim tiled fallback (resident weights too big for VMEM, e.g. v7x).
    # Grid = (batch_tiles, hidden_tiles); hidden axis is a reduction
    # ("arbitrary"), accumulated in an f32 VMEM scratch.
    k = pl.program_id(1)

    @pl.when(k == 0)
    def _():
        acc_ref[...] = jnp.zeros_like(acc_ref)

    x = x_ref[...].astype(w1_ref.dtype)
    h = jnp.dot(x, w1_ref[...], preferred_element_type=jnp.float32)
    h = jnp.maximum(h + b1_ref[...], 0.0)                # ReLU is per-hidden-unit => exact
    acc_ref[...] += jnp.dot(h.astype(w2_ref.dtype), w2_ref[...],
                            preferred_element_type=jnp.float32)

    @pl.when(k == pl.num_programs(1) - 1)
    def _():
        o_ref[...] = (acc_ref[...] + b2_ref[...]).astype(o_ref.dtype)


# ---------------------------------------------------------------------------
# Parameter preparation (one time, outside the forward path)
# ---------------------------------------------------------------------------

def prepare_params(w1, b1, w2, b2, compute_dtype=jnp.float32):
    """w1: [H, D_in] (fc1.weight), b1: [H], w2: [D_out, H] (out.weight), b2: [D_out]."""
    H, D_in = w1.shape
    D_out = w2.shape[0]
    H_p = _round_up(H, 128)
    # Lane-dense output only pays off for wide outputs; tiny D_out (e.g. the
    # output_size=1 regression head) stays unpadded to avoid 128x HBM writeback.
    D_out_p = _round_up(D_out, 128) if D_out >= 64 else D_out

    w1_t = jnp.zeros((D_in, H_p), compute_dtype).at[:, :H].set(
        w1.T.astype(compute_dtype))
    b1_r = jnp.zeros((1, H_p), jnp.float32).at[0, :H].set(b1.astype(jnp.float32))
    w2_t = jnp.zeros((H_p, D_out_p), compute_dtype).at[:H, :D_out].set(
        w2.T.astype(compute_dtype))
    b2_r = jnp.zeros((1, D_out_p), jnp.float32).at[0, :D_out].set(
        b2.astype(jnp.float32))

    # Zero padding is exact: padded hidden units give relu(0 + 0) = 0 and hit
    # zero rows of w2; padded output columns (if any) are sliced off.
    return {"w1": w1_t, "b1": b1_r, "w2": w2_t, "b2": b2_r,
            "d_in": D_in, "d_out": D_out}


# ---------------------------------------------------------------------------
# Forward
# ---------------------------------------------------------------------------

def nn_forward(x, params, *, block_b=512, hidden_block=512,
               out_dtype=None, force_hidden_tiling=False):
    """x: [B, D_in] -> [B, D_out]. `params` from prepare_params()."""
    B, D_in = x.shape
    assert D_in == params["d_in"], "input feature size mismatch"

    w1, b1, w2, b2 = params["w1"], params["b1"], params["w2"], params["b2"]
    D_out = params["d_out"]
    H_p = w1.shape[1]
    D_out_p = w2.shape[1]

    out_dtype = x.dtype if out_dtype is None else out_dtype
    cd_bytes = jnp.dtype(w1.dtype).itemsize
    x_bytes = jnp.dtype(x.dtype).itemsize
    o_bytes = jnp.dtype(out_dtype).itemsize

    budget = _vmem_budget_bytes()

    # Pad batch to a sublane multiple only if needed (cheap, XLA-fuseable).
    B8 = _round_up(B, 8)
    if B8 != B:
        x = jnp.pad(x, ((0, B8 - B), (0, 0)))

    # --- batch tile selection ---
    block_b = max(8, (int(block_b) // 8) * 8)        # force multiple of 8
    tb = min(block_b, B8)
    # v7x: guarantee >= 2 grid steps when the batch is big enough so both
    # TensorCores get work; no effect on single-TC v5e/v6e.
    if pl.cdiv(B8, tb) < 2 and B8 >= 16:
        tb = _round_up(pl.cdiv(B8, 2), 8)

    weight_bytes = (D_in * H_p + H_p * D_out_p) * cd_bytes + (H_p + D_out_p) * 4
    per_row_bytes = (2 * D_in * x_bytes + 2 * D_out_p * o_bytes
                     + H_p * 4 + 2 * D_out_p * 4)
    while tb > 8 and weight_bytes + tb * per_row_bytes > budget:
        tb = max(8, ((tb // 2) // 8) * 8)

    n_b = pl.cdiv(B8, tb)

    flops = 2 * B8 * (D_in * H_p + H_p * D_out_p)
    bytes_accessed = B8 * D_in * x_bytes + weight_bytes + B8 * D_out_p * o_bytes
    cost = pl.CostEstimate(flops=flops, transcendentals=0,
                           bytes_accessed=bytes_accessed)

    use_h_tiling = force_hidden_tiling or (weight_bytes > budget // 2)

    if not use_h_tiling:
        # Resident-weight path: weights/biases live in VMEM across the whole
        # batch grid; activations are auto double-buffered behind the matmuls.
        out = pl.pallas_call(
            _nn_kernel,
            out_shape=jax.ShapeDtypeStruct((B8, D_out_p), out_dtype),
            grid=(n_b,),
            in_specs=[
                pl.BlockSpec((tb, D_in), lambda i: (i, 0)),        # x tile (unpadded)
                pl.BlockSpec((D_in, H_p), lambda i: (0, 0)),       # w1 resident
                pl.BlockSpec((1, H_p), lambda i: (0, 0)),          # b1 resident
                pl.BlockSpec((H_p, D_out_p), lambda i: (0, 0)),    # w2 resident
                pl.BlockSpec((1, D_out_p), lambda i: (0, 0)),      # b2 resident
            ],
            out_specs=pl.BlockSpec((tb, D_out_p), lambda i: (i, 0)),
            compiler_params=pltpu.CompilerParams(
                dimension_semantics=("parallel",),
                vmem_limit_bytes=budget),
            cost_estimate=cost,
        )(x, w1, b1, w2, b2)
    else:
        # Hidden-dim tiled fallback (weights exceed the VMEM budget, e.g. on
        # v7x's 64 MiB per-TC VMEM). th must divide H_p exactly so no garbage
        # enters the accumulation (H_p is a multiple of 128).
        th = max(128, (min(_round_up(hidden_block, 128), H_p) // 128) * 128)
        while H_p % th:
            th -= 128
        n_h = H_p // th

        out = pl.pallas_call(
            _nn_kernel_htiled,
            out_shape=jax.ShapeDtypeStruct((B8, D_out_p), out_dtype),
            grid=(n_b, n_h),
            in_specs=[
                pl.BlockSpec((tb, D_in), lambda i, k: (i, 0)),     # x tile, reused over k
                pl.BlockSpec((D_in, th), lambda i, k: (0, k)),     # w1 hidden slab
                pl.BlockSpec((1, th), lambda i, k: (0, k)),        # b1 hidden slab
                pl.BlockSpec((th, D_out_p), lambda i, k: (k, 0)),  # w2 hidden slab
                pl.BlockSpec((1, D_out_p), lambda i, k: (0, 0)),   # b2 resident
            ],
            out_specs=pl.BlockSpec((tb, D_out_p), lambda i, k: (i, 0)),
            scratch_shapes=[pltpu.VMEM((tb, D_out_p), jnp.float32)],
            compiler_params=pltpu.CompilerParams(
                dimension_semantics=("parallel", "arbitrary"),
                vmem_limit_bytes=budget),
            cost_estimate=cost,
        )(x, w1, b1, w2, b2)

    return out[:B, :D_out]


def nn_forward_ref(x, w1, b1, w2, b2):
    h = jnp.maximum(x @ w1.T + b1, 0.0)
    return h @ w2.T + b2


# TODO(synk): the Pyro SVI machinery (guide/model, Normal priors, random_module
# lifting, ELBO) has no Pallas equivalent; only NN.forward is implemented here.

if __name__ == "__main__":
    key = jax.random.PRNGKey(0)

    def make_case(k, B, D_in, H, D_out):
        kx, kw1, kb1, kw2, kb2 = jax.random.split(k, 5)
        x = jax.random.normal(kx, (B, D_in), dtype=jnp.float32)
        # PyTorch Linear parameter shapes: weight [out, in], bias [out].
        w1 = jax.random.normal(kw1, (H, D_in), dtype=jnp.float32) * 0.1
        b1 = jax.random.normal(kb1, (H,), dtype=jnp.float32) * 0.1
        w2 = jax.random.normal(kw2, (D_out, H), dtype=jnp.float32) * 0.1
        b2 = jax.random.normal(kb2, (D_out,), dtype=jnp.float32) * 0.1
        return x, (w1, b1, w2, b2)

    k1, k2, k3 = jax.random.split(key, 3)

    # Case 1: spec-like small MLP NN(input_size=16, hidden=32, output=1).
    x, (w1, b1, w2, b2) = make_case(k1, 8, 16, 32, 1)
    y_ref = nn_forward_ref(x, w1, b1, w2, b2)
    p_f32 = prepare_params(w1, b1, w2, b2, compute_dtype=jnp.float32)
    y = jax.block_until_ready(nn_forward(x, p_f32))
    assert y.shape == (8, 1)
    assert jnp.allclose(y, y_ref, atol=1e-5, rtol=1e-5)
    # bf16 MXU path (f32 accumulation).
    p_bf16 = prepare_params(w1, b1, w2, b2, compute_dtype=jnp.bfloat16)
    y_bf16 = jax.block_until_ready(nn_forward(x, p_bf16))
    assert y_bf16.shape == (8, 1)
    assert jnp.allclose(y_bf16, y_ref, atol=5e-2, rtol=5e-2)

    # Case 2: non-multiple-of-8 batch + multi-tile grid with a ragged last tile.
    x, (w1, b1, w2, b2) = make_case(k2, 44, 16, 32, 1)
    y_ref = nn_forward_ref(x, w1, b1, w2, b2)
    p_f32 = prepare_params(w1, b1, w2, b2, compute_dtype=jnp.float32)
    y = jax.block_until_ready(nn_forward(x, p_f32, block_b=32))
    assert y.shape == (44, 1)
    assert jnp.allclose(y, y_ref, atol=1e-5, rtol=1e-5)

    # Case 3: hidden-dim-tiled fallback (the path used when resident weights
    # would overflow v7x's VMEM), forced at a small shape with 2 hidden tiles.
    x, (w1, b1, w2, b2) = make_case(k3, 24, 16, 200, 3)
    y_ref = nn_forward_ref(x, w1, b1, w2, b2)
    p_f32 = prepare_params(w1, b1, w2, b2, compute_dtype=jnp.float32)
    y = jax.block_until_ready(
        nn_forward(x, p_f32, force_hidden_tiling=True, hidden_block=128))
    assert y.shape == (24, 3)
    assert jnp.allclose(y, y_ref, atol=1e-5, rtol=1e-5)

    print("KERNEL_OK")
</pallas_src>

<mosaic_0001>
module attributes {stable_mosaic.version = 11 : i64} {
  func.func @_nn_kernel(%arg0: i32, %arg1: memref<8x16xf32, #tpu.memory_space<vmem>>, %arg2: memref<16x128xf32, #tpu.memory_space<vmem>>, %arg3: memref<1x128xf32, #tpu.memory_space<vmem>>, %arg4: memref<128x1xf32, #tpu.memory_space<vmem>>, %arg5: memref<1x1xf32, #tpu.memory_space<vmem>>, %arg6: memref<8x1xf32, #tpu.memory_space<vmem>>) attributes {dimension_semantics = [#tpu.dimension_semantics<parallel>], iteration_bounds = array<i64: 1>, scalar_prefetch = 0 : i64, scratch_operands = 0 : i64, tpu.core_type = #tpu.core_type<tc>, window_params = [{transform_indices = @transform_0, window_bounds = array<i64: 8, 16>}, {pipeline_mode = #tpu.pipeline_mode<synchronous>, transform_indices = @transform_1, window_bounds = array<i64: 16, 128>}, {pipeline_mode = #tpu.pipeline_mode<synchronous>, transform_indices = @transform_2, window_bounds = array<i64: 1, 128>}, {pipeline_mode = #tpu.pipeline_mode<synchronous>, transform_indices = @transform_3, window_bounds = array<i64: 128, 1>}, {pipeline_mode = #tpu.pipeline_mode<synchronous>, transform_indices = @transform_4, window_bounds = array<i64: 1, 1>}, {transform_indices = @transform_5, window_bounds = array<i64: 8, 1>}]} {
    %c0 = arith.constant 0 : index
    %c0_0 = arith.constant 0 : index
    %0 = vector.load %arg1[%c0, %c0_0] : memref<8x16xf32, #tpu.memory_space<vmem>>, vector<8x16xf32>
    %c0_1 = arith.constant 0 : index
    %c0_2 = arith.constant 0 : index
    %1 = vector.load %arg2[%c0_1, %c0_2] : memref<16x128xf32, #tpu.memory_space<vmem>>, vector<16x128xf32>
    %cst = arith.constant dense<0.000000e+00> : vector<8x128xf32>
    %2 = tpu.matmul %0, %1, %cst {dimension_numbers = #tpu.dot_dimension_numbers<[1], [0], [0], [1], [0, 0, 1, 1], [], []>} : vector<8x16xf32>, vector<16x128xf32>, vector<8x128xf32> -> vector<8x128xf32>
    %c0_3 = arith.constant 0 : index
    %c0_4 = arith.constant 0 : index
    %3 = vector.load %arg3[%c0_3, %c0_4] : memref<1x128xf32, #tpu.memory_space<vmem>>, vector<1x128xf32>
    %4 = vector.broadcast %3 : vector<1x128xf32> to vector<8x128xf32>
    %5 = arith.addf %2, %4 : vector<8x128xf32>
    %cst_5 = arith.constant 0.000000e+00 : f32
    %6 = vector.broadcast %cst_5 : f32 to vector<8x128xf32>
    %7 = arith.maximumf %5, %6 : vector<8x128xf32>
    %c0_6 = arith.constant 0 : index
    %c0_7 = arith.constant 0 : index
    %8 = vector.load %arg4[%c0_6, %c0_7] : memref<128x1xf32, #tpu.memory_space<vmem>>, vector<128x1xf32>
    %cst_8 = arith.constant dense<0.000000e+00> : vector<8x1xf32>
    %9 = tpu.matmul %7, %8, %cst_8 {dimension_numbers = #tpu.dot_dimension_numbers<[1], [0], [0], [1], [0, 0, 1, 1], [], []>} : vector<8x128xf32>, vector<128x1xf32>, vector<8x1xf32> -> vector<8x1xf32>
    %c0_9 = arith.constant 0 : index
    %c0_10 = arith.constant 0 : index
    %10 = vector.load %arg5[%c0_9, %c0_10] : memref<1x1xf32, #tpu.memory_space<vmem>>, vector<1x1xf32>
    %11 = vector.broadcast %10 : vector<1x1xf32> to vector<8x1xf32>
    %12 = arith.addf %9, %11 : vector<8x1xf32>
    %c0_11 = arith.constant 0 : index
    %c0_12 = arith.constant 0 : index
    %13 = vector.load %arg6[%c0_11, %c0_12] : memref<8x1xf32, #tpu.memory_space<vmem>>, vector<8x1xf32>
    tpu.vector_store %arg6[%c0_11, %c0_12], %12 {strides = array<i32>} : memref<8x1xf32, #tpu.memory_space<vmem>>, vector<8x1xf32>,
    return
  }
  func.func @transform_0(%arg0: i32) -> (i32, i32) {
    %c0_i32 = arith.constant 0 : i32
    %c0_i32_0 = arith.constant 0 : i32
    return %arg0, %c0_i32 : i32, i32
  }
  func.func @transform_1(%arg0: i32) -> (i32, i32) {
    %c0_i32 = arith.constant 0 : i32
    %c0_i32_0 = arith.constant 0 : i32
    %c0_i32_1 = arith.constant 0 : i32
    return %c0_i32, %c0_i32_0 : i32, i32
  }
  func.func @transform_2(%arg0: i32) -> (i32, i32) {
    %c0_i32 = arith.constant 0 : i32
    %c0_i32_0 = arith.constant 0 : i32
    %c0_i32_1 = arith.constant 0 : i32
    return %c0_i32, %c0_i32_0 : i32, i32
  }
  func.func @transform_3(%arg0: i32) -> (i32, i32) {
    %c0_i32 = arith.constant 0 : i32
    %c0_i32_0 = arith.constant 0 : i32
    %c0_i32_1 = arith.constant 0 : i32
    return %c0_i32, %c0_i32_0 : i32, i32
  }
  func.func @transform_4(%arg0: i32) -> (i32, i32) {
    %c0_i32 = arith.constant 0 : i32
    %c0_i32_0 = arith.constant 0 : i32
    %c0_i32_1 = arith.constant 0 : i32
    return %c0_i32, %c0_i32_0 : i32, i32
  }
  func.func @transform_5(%arg0: i32) -> (i32, i32) {
    %c0_i32 = arith.constant 0 : i32
    %c0_i32_0 = arith.constant 0 : i32
    return %arg0, %c0_i32 : i32, i32
  }
}

</mosaic_0001>

<llo_original>
// kernel: tpu_custom_call.1
$region0: #{tpu_custom_call.1}
  #allocation0 [shape = 'u32[]', space=smem, size = 0x4, offset = 0x4, fixed_abs, tag = 'smem constant byte address 0x4 - core index']
  #allocation1 [shape = 'u32[72,128]{1,0:T(1,128)}', space=vmem, size = 0x9000, scoped, tag = 'internal scratch']
  #allocation2 [shape = 'f32[1,1]{1,0:T(1,128)S(1)}', space=vmem, size = 0x200, scoped, tag = 'scoped memory for tpu_custom_call.1']
  %s0 = inlined_call_operand.vmem [shape: f32[8,16], index: 0, kind: input, shape index: {}]
  %s1 = inlined_call_operand.vmem [shape: f32[16,128], index: 1, kind: input, shape index: {}]
  %s2 = inlined_call_operand.vmem [shape: f32[1,128], index: 2, kind: input, shape index: {}]
  %s3 = inlined_call_operand.vmem [shape: f32[128,1], index: 3, kind: input, shape index: {}]
  %s4 = inlined_call_operand.<no memory space> [shape: f32[1,1], index: 4, kind: input, shape index: {}]
  %s5 = inlined_call_operand.vmem [shape: f32[8,1], index: 5, kind: output, shape index: {}]
  %s6 = sld [smem:[#allocation0]]
  $region30: #{tpu_custom_call.1} parent=0
    _
  %s8 = ssub.s32 1, %s6
  %s9 = scalar_select 0, %s8, %s6
  %v10 = vstv %s4
  %11 = vst [vmem:[#allocation2] sm:$0x1] %v10
  // Predicated region
  $region2: #{tpu_custom_call.1} parent=0 // pred_check
    _
  $region3: #{tpu_custom_call.1} parent=0 // pred_check_branch
    %13 = sbr.rel (0) target = $region5
  $region4: #{tpu_custom_call.1} parent=0 // pred_region
    _
  $region5: #{tpu_custom_call.1} parent=0 // pred_fallthru
    _
  // Predicated region
  $region6: #{tpu_custom_call.1} parent=0 // pred_check
    _
  $region7: #{tpu_custom_call.1} parent=0 // pred_check_branch
    %15 = sbr.rel (0) target = $region9
  $region8: #{tpu_custom_call.1} parent=0 // pred_region
    _
  $region9: #{tpu_custom_call.1} parent=0 // pred_fallthru
    _
  // Predicated region
  $region10: #{tpu_custom_call.1} parent=0 // pred_check
    _
  $region11: #{tpu_custom_call.1} parent=0 // pred_check_branch
    %17 = sbr.rel (0) target = $region13
  $region12: #{tpu_custom_call.1} parent=0 // pred_region
    _
  $region13: #{tpu_custom_call.1} parent=0 // pred_fallthru
    _
  // Predicated region
  $region14: #{tpu_custom_call.1} parent=0 // pred_check
    _
  $region15: #{tpu_custom_call.1} parent=0 // pred_check_branch
    %19 = sbr.rel (0) target = $region17
  $region16: #{tpu_custom_call.1} parent=0 // pred_region
    _
  $region17: #{tpu_custom_call.1} parent=0 // pred_fallthru
    _
  // Predicated region
  $region18: #{tpu_custom_call.1} parent=0 // pred_check
    _
  $region19: #{tpu_custom_call.1} parent=0 // pred_check_branch
    %21 = sbr.rel (0) target = $region21
  $region20: #{tpu_custom_call.1} parent=0 // pred_region
    _
  $region21: #{tpu_custom_call.1} parent=0 // pred_fallthru
    _
  %v22 = vld [vmem:[%s0] sm:$0xff]
  %v23 = vld [vmem:[%s1] sm:$0xff]
  %v24 = vld [vmem:[%s1 + $0x8] sm:$0xff]
  %v25 = vld [vmem:[%s2] sm:$0x1]
  %v27 = vperm.slane %v25, 0
  %vm29 = vcmask 130048
  %v31 = vsel %vm29, %v22, 0
  %33 = vmatpush.msra.mxu0 0.0
  %34 = vmatpush.msra.mxu0 0.0
  %35 = vmatpush.msra.mxu0 0.0
  %36 = vmatpush.msra.mxu0 0.0
  %37 = vmatpush.msra.mxu0 0.0
  %38 = vmatpush.msra.mxu0 0.0
  %39 = vmatpush.msra.mxu0 0.0
  %40 = vmatpush.msra.mxu0 0.0
  %41 = vmatpush.msra.mxu0 0.0
  %42 = vmatpush.msra.mxu0 0.0
  %43 = vmatpush.msra.mxu0 0.0
  %44 = vmatpush.msra.mxu0 0.0
  %45 = vmatpush.msra.mxu0 0.0
  %46 = vmatpush.msra.mxu0 0.0
  %47 = vmatpush.msra.mxu0 %v24
  %48 = vmatpush.msra.mxu0 %v23
  %49 = vmatmul.f32.gmra.mxu0 %v31
  %v50 = vpop.f32.mrf.mxu0
  %v51 = vadd.f32 %v27, %v50
  %52 = vdwg.mxu0
  %v53 = vmax.f32 %v51, 0.0
  %v54 = vld [vmem:[%s3] sm:$0xff]
  %v55 = vld [vmem:[%s3 + $0x8] sm:$0xff]
  %v56 = vld [vmem:[%s3 + $0x10] sm:$0xff]
  %v57 = vld [vmem:[%s3 + $0x18] sm:$0xff]
  %v58 = vld [vmem:[%s3 + $0x20] sm:$0xff]
  %v59 = vld [vmem:[%s3 + $0x28] sm:$0xff]
  %v60 = vld [vmem:[%s3 + $0x30] sm:$0xff]
  %v61 = vld [vmem:[%s3 + $0x38] sm:$0xff]
  %v62 = vld [vmem:[%s3 + $0x40] sm:$0xff]
  %v63 = vld [vmem:[%s3 + $0x48] sm:$0xff]
  %v64 = vld [vmem:[%s3 + $0x50] sm:$0xff]
  %v65 = vld [vmem:[%s3 + $0x58] sm:$0xff]
  %v66 = vld [vmem:[%s3 + $0x60] sm:$0xff]
  %v67 = vld [vmem:[%s3 + $0x68] sm:$0xff]
  %v68 = vld [vmem:[%s3 + $0x70] sm:$0xff]
  %v69 = vld [vmem:[%s3 + $0x78] sm:$0xff]
  %v70 = vld [vmem:[#allocation2] sm:$0x1]
  %v72 = vperm.slane %v70, 0
  %74 = vmatpush.msra.mxu0 %v69
  %75 = vmatpush.msra.mxu0 %v68
  %76 = vmatpush.msra.mxu0 %v67
  %77 = vmatpush.msra.mxu0 %v66
  %78 = vmatpush.msra.mxu0 %v65
  %79 = vmatpush.msra.mxu0 %v64
  %80 = vmatpush.msra.mxu0 %v63
  %81 = vmatpush.msra.mxu0 %v62
  %82 = vmatpush.msra.mxu0 %v61
  %83 = vmatpush.msra.mxu0 %v60
  %84 = vmatpush.msra.mxu0 %v59
  %85 = vmatpush.msra.mxu0 %v58
  %86 = vmatpush.msra.mxu0 %v57
  %87 = vmatpush.msra.mxu0 %v56
  %88 = vmatpush.msra.mxu0 %v55
  %89 = vmatpush.msra.mxu0 %v54
  %90 = vmatmul.f32.gmra.mxu0 %v53
  %v91 = vpop.f32.mrf.mxu0
  %v92 = vadd.f32 %v72, %v91
  %93 = vdwg.mxu0
  %vm94 = vcmask 7168
  %95 = vst.msk [vmem:[%s5] sm:$0xff] %vm94, %v92
  // Predicated region
  $region22: #{tpu_custom_call.1} parent=0 // pred_check
    _
  $region23: #{tpu_custom_call.1} parent=0 // pred_check_branch
    %97 = sbr.rel (0) target = $region25
  $region24: #{tpu_custom_call.1} parent=0 // pred_region
    _
  $region25: #{tpu_custom_call.1} parent=0 // pred_fallthru
    _
  // Predicated region
  $region26: #{tpu_custom_call.1} parent=0 // pred_check
    _
  $region27: #{tpu_custom_call.1} parent=0 // pred_check_branch
    %99 = sbr.rel (0) target = $region29
  $region28: #{tpu_custom_call.1} parent=0 // pred_region
    _
  $region29: #{tpu_custom_call.1} parent=0 // pred_fallthru
    _

</llo_original>
